<compile_context>
chip_gen: v7x
topology: tpu7x:2x2x1
jax: 0.10.0
libtpu: 0.0.40
codegen_flags: <defaults>
</compile_context>

<pallas_src>
import functools

import jax
import jax.numpy as jnp
from jax.experimental import pallas as pl
from jax.experimental.pallas import tpu as pltpu


def _round_up(x, m):
    return ((x + m - 1) // m) * m


# ----------------------------------------------------------------------------
# Kernel
# ----------------------------------------------------------------------------
def fused_actor_critic_kernel(x_ref, w1_ref, b1_ref, w2_ref, b2_ref, w3_ref, b3_ref,
                              out_ref, *, action_dim):
    x = x_ref[...]                                                    # (TB, S) raw state tile

    # fused layer 1 + ReLU  (actor cols [0,H_PAD), critic cols [H_PAD, 2*H_PAD))
    y = jnp.dot(x, w1_ref[...], preferred_element_type=jnp.float32) + b1_ref[...]
    y = jnp.maximum(y, 0.0)
    # fused (block-diagonal) layer 2 + ReLU
    y = jnp.dot(y, w2_ref[...], preferred_element_type=jnp.float32) + b2_ref[...]
    y = jnp.maximum(y, 0.0)
    # fused layer 3: actor logits in lanes [0, A), critic value in lane A, zeros elsewhere
    z = jnp.dot(y, w3_ref[...], preferred_element_type=jnp.float32) + b3_ref[...]

    # numerically-stable softmax restricted to the actor lanes
    lane = jax.lax.broadcasted_iota(jnp.int32, z.shape, dimension=1)
    actor_mask = lane < action_dim
    logits = jnp.where(actor_mask, z, jnp.float32(-1e30))             # kill non-actor lanes
    m = jnp.max(logits, axis=-1, keepdims=True)
    e = jnp.exp(logits - m)
    denom = jnp.sum(e, axis=-1, keepdims=True)
    probs = e * pl.reciprocal(denom, approx=False)                    # exact: keeps 1e-5 tol

    # lane-dense output slab: [probs (A lanes) | value (1 lane) | zeros]
    out_ref[...] = jnp.where(actor_mask, probs,
                             jnp.where(lane == action_dim, z, 0.0))


# ----------------------------------------------------------------------------
# Wrapper
# ----------------------------------------------------------------------------
def actor_critic_forward(state, fused, *, batch_tile=2048, core_parallel=False):
    """state: (B, state_dim).  fused: dict from fuse_actor_critic_params."""
    B, S = state.shape
    action_dim = fused["action_dim"]
    w1, b1 = fused["w1"], fused["b1"]
    w2, b2 = fused["w2"], fused["b2"]
    w3, b3 = fused["w3"], fused["b3"]
    assert w1.shape[0] == S, "fused w1 must match raw state_dim (no input padding)"
    H2 = w1.shape[1]
    OUT = w3.shape[1]

    state = state.astype(jnp.float32)

    # Batch tile: multiple of 8 sublanes; 4096-row cap keeps double-buffered in/out tiles
    # (~4.3 MiB at TB=4096) well under v5e's 16 MiB default scoped VMEM.
    TB = min(batch_tile, 4096, _round_up(B, 8))
    grid = pl.cdiv(B, TB)                      # no round-up of B to TB: partial last block OK

    def _resident(shape):
        # weights/biases stay in VMEM across the whole batch grid
        return pl.BlockSpec(shape, lambda i: (0, 0))

    grid_spec = pltpu.PrefetchScalarGridSpec(
        num_scalar_prefetch=0,
        grid=(grid,),
        in_specs=[
            pl.BlockSpec((TB, S), lambda i: (i, 0)),   # raw state tile (pipelined, unpadded)
            _resident((S, H2)),   _resident((1, H2)),  # fused layer 1
            _resident((H2, H2)),  _resident((1, H2)),  # fused layer 2
            _resident((H2, OUT)), _resident((1, OUT)), # fused layer 3
        ],
        out_specs=pl.BlockSpec((TB, OUT), lambda i: (i, 0)),
    )

    # v7x: use CORE_PARALLEL on the batch axis to engage the 2nd TensorCore (only when the
    # grid actually has >=2 steps). Default off so v5e/v6e single-core chips lower cleanly.
    if core_parallel and grid >= 2:
        dim_sem = (pltpu.CORE_PARALLEL,)
    else:
        dim_sem = ("arbitrary",)

    flops = 2 * B * (S * H2 + H2 * H2 + H2 * OUT)
    bytes_accessed = 4 * (B * S + S * H2 + H2 * H2 + H2 * OUT
                          + 2 * H2 + OUT + B * OUT)

    out = pl.pallas_call(
        functools.partial(fused_actor_critic_kernel, action_dim=action_dim),
        out_shape=jax.ShapeDtypeStruct((B, OUT), jnp.float32),
        grid_spec=grid_spec,
        compiler_params=pltpu.CompilerParams(dimension_semantics=dim_sem),
        cost_estimate=pl.CostEstimate(
            flops=flops, transcendentals=B * OUT, bytes_accessed=bytes_accessed),
    )(state, w1, b1, w2, b2, w3, b3)

    # slab -> (probs, value); done inside the caller's jit so XLA fuses the epilogue
    probs = out[:, :action_dim]
    value = out[:, action_dim:action_dim + 1]
    return probs, value


# ----------------------------------------------------------------------------
# Parameter init (PyTorch-style) + fusion/padding
# ----------------------------------------------------------------------------
def init_linear(key, in_features, out_features):
    """PyTorch-style uniform(-1/sqrt(fan_in), 1/sqrt(fan_in)); weight pre-transposed (in, out)."""
    k_w, k_b = jax.random.split(key)
    bound = 1.0 / jnp.sqrt(jnp.float32(in_features))
    w = jax.random.uniform(k_w, (in_features, out_features), jnp.float32, -bound, bound)
    b = jax.random.uniform(k_b, (1, out_features), jnp.float32, -bound, bound)
    return w, b


def init_actor_critic_params(key, state_dim, action_dim, hidden_size):
    keys = jax.random.split(key, 6)
    a_w1, a_b1 = init_linear(keys[0], state_dim, hidden_size)
    a_w2, a_b2 = init_linear(keys[1], hidden_size, hidden_size)
    a_w3, a_b3 = init_linear(keys[2], hidden_size, action_dim)
    c_w1, c_b1 = init_linear(keys[3], state_dim, hidden_size)
    c_w2, c_b2 = init_linear(keys[4], hidden_size, hidden_size)
    c_w3, c_b3 = init_linear(keys[5], hidden_size, 1)
    return dict(
        a_w1=a_w1, a_b1=a_b1, a_w2=a_w2, a_b2=a_b2, a_w3=a_w3, a_b3=a_b3,
        c_w1=c_w1, c_b1=c_b1, c_w2=c_w2, c_b2=c_b2, c_w3=c_w3, c_b3=c_b3,
    )


def fuse_actor_critic_params(params, state_dim, action_dim, hidden_size):
    """Build block-diagonal fused weights (done once, outside the kernel).

    Rows of w1 are the raw state_dim (no lane padding of the input); hidden lanes are
    padded to 64 per path (combined 128 = one lane width); outputs padded to 128 lanes.
    All padding is exact zeros, so results are bit-compatible with the unfused model.
    """
    assert action_dim + 1 <= 128, "output slab assumes action_dim + 1 <= 128"
    H_PAD = max(_round_up(hidden_size, 64), 64)     # combined hidden = 2*H_PAD (multiple of 128)
    H2 = 2 * H_PAD
    OUT = max(_round_up(action_dim + 1, 128), 128)
    f32 = jnp.float32
    H = hidden_size

    w1 = jnp.zeros((state_dim, H2), f32)
    w1 = w1.at[:, :H].set(params["a_w1"])
    w1 = w1.at[:, H_PAD:H_PAD + H].set(params["c_w1"])
    b1 = jnp.zeros((1, H2), f32)
    b1 = b1.at[:, :H].set(params["a_b1"])
    b1 = b1.at[:, H_PAD:H_PAD + H].set(params["c_b1"])

    w2 = jnp.zeros((H2, H2), f32)
    w2 = w2.at[:H, :H].set(params["a_w2"])
    w2 = w2.at[H_PAD:H_PAD + H, H_PAD:H_PAD + H].set(params["c_w2"])
    b2 = jnp.zeros((1, H2), f32)
    b2 = b2.at[:, :H].set(params["a_b2"])
    b2 = b2.at[:, H_PAD:H_PAD + H].set(params["c_b2"])

    w3 = jnp.zeros((H2, OUT), f32)
    w3 = w3.at[:H, :action_dim].set(params["a_w3"])
    w3 = w3.at[H_PAD:H_PAD + H, action_dim:action_dim + 1].set(params["c_w3"])
    b3 = jnp.zeros((1, OUT), f32)
    b3 = b3.at[:, :action_dim].set(params["a_b3"])
    b3 = b3.at[:, action_dim:action_dim + 1].set(params["c_b3"])

    return dict(w1=w1, b1=b1, w2=w2, b2=b2, w3=w3, b3=b3, action_dim=action_dim)


def reference_forward(state, p):
    """Pure-JAX reference of the PyTorch forward."""
    h = jax.nn.relu(state @ p["a_w1"] + p["a_b1"])
    h = jax.nn.relu(h @ p["a_w2"] + p["a_b2"])
    probs = jax.nn.softmax(h @ p["a_w3"] + p["a_b3"], axis=-1)
    g = jax.nn.relu(state @ p["c_w1"] + p["c_b1"])
    g = jax.nn.relu(g @ p["c_w2"] + p["c_b2"])
    value = g @ p["c_w3"] + p["c_b3"]
    return probs, value


if __name__ == "__main__":
    # small shapes consistent with the module: state_dim=16, action_dim=4, hidden=10, batch=8
    batch, state_dim, action_dim, hidden_size = 8, 16, 4, 10

    key = jax.random.PRNGKey(0)
    k_params, k_state = jax.random.split(key)
    params = init_actor_critic_params(k_params, state_dim, action_dim, hidden_size)
    fused = fuse_actor_critic_params(params, state_dim, action_dim, hidden_size)
    state = jax.random.normal(k_state, (batch, state_dim), jnp.float32)

    # jit the whole forward so the slab slices fuse with the rest of the program
    fwd = jax.jit(functools.partial(actor_critic_forward, fused=fused))
    probs, value = fwd(state)
    probs = jax.block_until_ready(probs)
    value = jax.block_until_ready(value)

    ref_probs, ref_value = reference_forward(state, params)
    assert probs.shape == (batch, action_dim) and value.shape == (batch, 1)
    assert jnp.allclose(probs, ref_probs, atol=1e-5, rtol=1e-5)
    assert jnp.allclose(value, ref_value, atol=1e-5, rtol=1e-5)
    assert jnp.allclose(jnp.sum(probs, axis=-1), 1.0, atol=1e-5)

    print("KERNEL_OK")
</pallas_src>

<mosaic_0001>
module attributes {stable_mosaic.version = 11 : i64} {
  func.func @fused_actor_critic_kernel(%arg0: i32, %arg1: memref<8x16xf32, #tpu.memory_space<vmem>>, %arg2: memref<16x128xf32, #tpu.memory_space<vmem>>, %arg3: memref<1x128xf32, #tpu.memory_space<vmem>>, %arg4: memref<128x128xf32, #tpu.memory_space<vmem>>, %arg5: memref<1x128xf32, #tpu.memory_space<vmem>>, %arg6: memref<128x128xf32, #tpu.memory_space<vmem>>, %arg7: memref<1x128xf32, #tpu.memory_space<vmem>>, %arg8: memref<8x128xf32, #tpu.memory_space<vmem>>) attributes {dimension_semantics = [#tpu.dimension_semantics<arbitrary>], iteration_bounds = array<i64: 1>, scalar_prefetch = 0 : i64, scratch_operands = 0 : i64, tpu.core_type = #tpu.core_type<tc>, window_params = [{transform_indices = @transform_0, window_bounds = array<i64: 8, 16>}, {pipeline_mode = #tpu.pipeline_mode<synchronous>, transform_indices = @transform_1, window_bounds = array<i64: 16, 128>}, {pipeline_mode = #tpu.pipeline_mode<synchronous>, transform_indices = @transform_2, window_bounds = array<i64: 1, 128>}, {pipeline_mode = #tpu.pipeline_mode<synchronous>, transform_indices = @transform_3, window_bounds = array<i64: 128, 128>}, {pipeline_mode = #tpu.pipeline_mode<synchronous>, transform_indices = @transform_4, window_bounds = array<i64: 1, 128>}, {pipeline_mode = #tpu.pipeline_mode<synchronous>, transform_indices = @transform_5, window_bounds = array<i64: 128, 128>}, {pipeline_mode = #tpu.pipeline_mode<synchronous>, transform_indices = @transform_6, window_bounds = array<i64: 1, 128>}, {transform_indices = @transform_7, window_bounds = array<i64: 8, 128>}]} {
    %c0 = arith.constant 0 : index
    %c0_0 = arith.constant 0 : index
    %0 = vector.load %arg1[%c0, %c0_0] : memref<8x16xf32, #tpu.memory_space<vmem>>, vector<8x16xf32>
    %c0_1 = arith.constant 0 : index
    %c0_2 = arith.constant 0 : index
    %1 = vector.load %arg2[%c0_1, %c0_2] : memref<16x128xf32, #tpu.memory_space<vmem>>, vector<16x128xf32>
    %cst = arith.constant dense<0.000000e+00> : vector<8x128xf32>
    %2 = tpu.matmul %0, %1, %cst {dimension_numbers = #tpu.dot_dimension_numbers<[1], [0], [0], [1], [0, 0, 1, 1], [], []>} : vector<8x16xf32>, vector<16x128xf32>, vector<8x128xf32> -> vector<8x128xf32>
    %c0_3 = arith.constant 0 : index
    %c0_4 = arith.constant 0 : index
    %3 = vector.load %arg3[%c0_3, %c0_4] : memref<1x128xf32, #tpu.memory_space<vmem>>, vector<1x128xf32>
    %4 = vector.broadcast %3 : vector<1x128xf32> to vector<8x128xf32>
    %5 = arith.addf %2, %4 : vector<8x128xf32>
    %cst_5 = arith.constant 0.000000e+00 : f32
    %6 = vector.broadcast %cst_5 : f32 to vector<8x128xf32>
    %7 = arith.maximumf %5, %6 : vector<8x128xf32>
    %c0_6 = arith.constant 0 : index
    %c0_7 = arith.constant 0 : index
    %8 = vector.load %arg4[%c0_6, %c0_7] : memref<128x128xf32, #tpu.memory_space<vmem>>, vector<128x128xf32>
    %cst_8 = arith.constant dense<0.000000e+00> : vector<8x128xf32>
    %9 = tpu.matmul %7, %8, %cst_8 {dimension_numbers = #tpu.dot_dimension_numbers<[1], [0], [0], [1], [0, 0, 1, 1], [], []>} : vector<8x128xf32>, vector<128x128xf32>, vector<8x128xf32> -> vector<8x128xf32>
    %c0_9 = arith.constant 0 : index
    %c0_10 = arith.constant 0 : index
    %10 = vector.load %arg5[%c0_9, %c0_10] : memref<1x128xf32, #tpu.memory_space<vmem>>, vector<1x128xf32>
    %11 = vector.broadcast %10 : vector<1x128xf32> to vector<8x128xf32>
    %12 = arith.addf %9, %11 : vector<8x128xf32>
    %cst_11 = arith.constant 0.000000e+00 : f32
    %13 = vector.broadcast %cst_11 : f32 to vector<8x128xf32>
    %14 = arith.maximumf %12, %13 : vector<8x128xf32>
    %c0_12 = arith.constant 0 : index
    %c0_13 = arith.constant 0 : index
    %15 = vector.load %arg6[%c0_12, %c0_13] : memref<128x128xf32, #tpu.memory_space<vmem>>, vector<128x128xf32>
    %cst_14 = arith.constant dense<0.000000e+00> : vector<8x128xf32>
    %16 = tpu.matmul %14, %15, %cst_14 {dimension_numbers = #tpu.dot_dimension_numbers<[1], [0], [0], [1], [0, 0, 1, 1], [], []>} : vector<8x128xf32>, vector<128x128xf32>, vector<8x128xf32> -> vector<8x128xf32>
    %c0_15 = arith.constant 0 : index
    %c0_16 = arith.constant 0 : index
    %17 = vector.load %arg7[%c0_15, %c0_16] : memref<1x128xf32, #tpu.memory_space<vmem>>, vector<1x128xf32>
    %18 = vector.broadcast %17 : vector<1x128xf32> to vector<8x128xf32>
    %19 = arith.addf %16, %18 : vector<8x128xf32>
    %20 = tpu.iota {dimensions = array<i32: 1>} : vector<8x128xi32>
    %c4_i32 = arith.constant 4 : i32
    %21 = vector.broadcast %c4_i32 : i32 to vector<8x128xi32>
    %22 = arith.cmpi slt, %20, %21 : vector<8x128xi32>
    %cst_17 = arith.constant -1.000000e+30 : f32
    %23 = vector.broadcast %cst_17 : f32 to vector<8x128xf32>
    %24 = arith.select %22, %19, %23 : vector<8x128xi1>, vector<8x128xf32>
    %cst_18 = arith.constant dense<0xFF800000> : vector<8xf32>
    %25 = vector.multi_reduction <maximumf>, %24, %cst_18 [1] : vector<8x128xf32> to vector<8xf32>
    %26 = vector.shape_cast %25 : vector<8xf32> to vector<8x1xf32>
    %27 = vector.broadcast %26 : vector<8x1xf32> to vector<8x128xf32>
    %28 = arith.subf %24, %27 : vector<8x128xf32>
    %29 = math.exp %28 : vector<8x128xf32>
    %cst_19 = arith.constant dense<0.000000e+00> : vector<8xf32>
    %30 = vector.multi_reduction <add>, %29, %cst_19 [1] : vector<8x128xf32> to vector<8xf32>
    %31 = vector.shape_cast %30 : vector<8xf32> to vector<8x1xf32>
    %32 = tpu.reciprocal %31 : vector<8x1xf32> -> vector<8x1xf32>
    %33 = vector.broadcast %32 : vector<8x1xf32> to vector<8x128xf32>
    %34 = arith.mulf %29, %33 : vector<8x128xf32>
    %c4_i32_20 = arith.constant 4 : i32
    %35 = vector.broadcast %c4_i32_20 : i32 to vector<8x128xi32>
    %36 = arith.cmpi eq, %20, %35 : vector<8x128xi32>
    %cst_21 = arith.constant 0.000000e+00 : f32
    %37 = vector.broadcast %cst_21 : f32 to vector<8x128xf32>
    %38 = arith.select %36, %19, %37 : vector<8x128xi1>, vector<8x128xf32>
    %39 = arith.select %22, %34, %38 : vector<8x128xi1>, vector<8x128xf32>
    %c0_22 = arith.constant 0 : index
    %c0_23 = arith.constant 0 : index
    %40 = vector.load %arg8[%c0_22, %c0_23] : memref<8x128xf32, #tpu.memory_space<vmem>>, vector<8x128xf32>
    tpu.vector_store %arg8[%c0_22, %c0_23], %39 {strides = array<i32>} : memref<8x128xf32, #tpu.memory_space<vmem>>, vector<8x128xf32>,
    return
  }
  func.func @transform_0(%arg0: i32) -> (i32, i32) {
    %c0_i32 = arith.constant 0 : i32
    %c0_i32_0 = arith.constant 0 : i32
    return %arg0, %c0_i32 : i32, i32
  }
  func.func @transform_1(%arg0: i32) -> (i32, i32) {
    %c0_i32 = arith.constant 0 : i32
    %c0_i32_0 = arith.constant 0 : i32
    %c0_i32_1 = arith.constant 0 : i32
    return %c0_i32, %c0_i32_0 : i32, i32
  }
  func.func @transform_2(%arg0: i32) -> (i32, i32) {
    %c0_i32 = arith.constant 0 : i32
    %c0_i32_0 = arith.constant 0 : i32
    %c0_i32_1 = arith.constant 0 : i32
    return %c0_i32, %c0_i32_0 : i32, i32
  }
  func.func @transform_3(%arg0: i32) -> (i32, i32) {
    %c0_i32 = arith.constant 0 : i32
    %c0_i32_0 = arith.constant 0 : i32
    %c0_i32_1 = arith.constant 0 : i32
    return %c0_i32, %c0_i32_0 : i32, i32
  }
  func.func @transform_4(%arg0: i32) -> (i32, i32) {
    %c0_i32 = arith.constant 0 : i32
    %c0_i32_0 = arith.constant 0 : i32
    %c0_i32_1 = arith.constant 0 : i32
    return %c0_i32, %c0_i32_0 : i32, i32
  }
  func.func @transform_5(%arg0: i32) -> (i32, i32) {
    %c0_i32 = arith.constant 0 : i32
    %c0_i32_0 = arith.constant 0 : i32
    %c0_i32_1 = arith.constant 0 : i32
    return %c0_i32, %c0_i32_0 : i32, i32
  }
  func.func @transform_6(%arg0: i32) -> (i32, i32) {
    %c0_i32 = arith.constant 0 : i32
    %c0_i32_0 = arith.constant 0 : i32
    %c0_i32_1 = arith.constant 0 : i32
    return %c0_i32, %c0_i32_0 : i32, i32
  }
  func.func @transform_7(%arg0: i32) -> (i32, i32) {
    %c0_i32 = arith.constant 0 : i32
    %c0_i32_0 = arith.constant 0 : i32
    return %arg0, %c0_i32 : i32, i32
  }
}

</mosaic_0001>

<llo_original>
// kernel: actor_critic_forward.1
$region0: #{actor_critic_forward.1}
  #allocation0 [shape = 'u32[]', space=smem, size = 0x4, offset = 0x4, fixed_abs, tag = 'smem constant byte address 0x4 - core index']
  #allocation1 [shape = 'u32[144,128]{1,0:T(1,128)}', space=vmem, size = 0x12000, scoped, tag = 'internal scratch']
  %s0 = inlined_call_operand.hbm [shape: f32[8,16], index: 0, kind: input, shape index: {}]
  %s1 = inlined_call_operand.hbm [shape: f32[16,128], index: 1, kind: input, shape index: {}]
  %s2 = inlined_call_operand.vmem [shape: f32[1,128], index: 2, kind: input, shape index: {}]
  %s3 = inlined_call_operand.hbm [shape: f32[128,128], index: 3, kind: input, shape index: {}]
  %s4 = inlined_call_operand.vmem [shape: f32[1,128], index: 4, kind: input, shape index: {}]
  %s5 = inlined_call_operand.hbm [shape: f32[128,128], index: 5, kind: input, shape index: {}]
  %s6 = inlined_call_operand.vmem [shape: f32[1,128], index: 6, kind: input, shape index: {}]
  %s7 = inlined_call_operand.vmem [shape: f32[8,128], index: 7, kind: output, shape index: {}]
  %s8 = sld [smem:[#allocation0]]
  $region54: #{actor_critic_forward.1} parent=0
    _
  %s10 = ssub.s32 1, %s8
  %s11 = scalar_select 0, %s10, %s8
  $region1: #{actor_critic_forward.1} parent=0
    #allocation2 [shape = 'u8[4096]{0}', space=vmem, size = 0x1000, scoped, tag = 'input window, operand 0, single buffered']
    #allocation3 [shape = 's32[1]{0}', space=sflag, size = 0x4, scoped, tag = 'scoped memory for actor_critic_forward.1']
    #allocation4 [shape = 'u8[8192]{0}', space=vmem, size = 0x2000, scoped, tag = 'input window, operand 1, single buffered']
    #allocation5 [shape = 's32[1]{0}', space=sflag, size = 0x4, scoped, tag = 'scoped memory for actor_critic_forward.1']
    #allocation6 [shape = 'u8[65536]{0}', space=vmem, size = 0x10000, scoped, tag = 'input window, operand 3, single buffered']
    #allocation7 [shape = 'u8[65536]{0}', space=vmem, size = 0x10000, scoped, tag = 'input window, operand 5, single buffered']
    #allocation8 [shape = 's32[1]{0}', space=sflag, size = 0x4, scoped, tag = 'scoped memory for actor_critic_forward.1']
    %12 = vsyncpa [#allocation3], 0
    %13 = vsyncpa [#allocation5], 0
    %14 = vsyncpa [#allocation8], 0
    // Predicated region
    $region2: #{actor_critic_forward.1} parent=1 // pred_check
      _
    $region3: #{actor_critic_forward.1} parent=1 // pred_check_branch
      %16 = sbr.rel (0) target = $region5
    $region4: #{actor_critic_forward.1} parent=1 // pred_region
      %s18 = ssub.s32 128, 128
      %19 = vsyncadd [#allocation3], %s18
      %s21 = sshll.u32 [#allocation2], 4
      %s22 = int_to_ptr.vmem [resolvable:$true] %s21
      %24 = dma.hbm_to_vmem [thread:$0]  %s0, 128, %s22, [#allocation3]
    $region5: #{actor_critic_forward.1} parent=1 // pred_fallthru
      _
    // Predicated region
    $region6: #{actor_critic_forward.1} parent=1 // pred_check
      _
    $region7: #{actor_critic_forward.1} parent=1 // pred_check_branch
      %26 = sbr.rel (0) target = $region9
    $region8: #{actor_critic_forward.1} parent=1 // pred_region
      %s28 = ssub.s32 256, 256
      %29 = vsyncadd [#allocation5], %s28
      %s30 = sshll.u32 [#allocation4], 4
      %s31 = int_to_ptr.vmem [resolvable:$true] %s30
      %36 = dma.hbm_to_vmem [thread:$0]  %s1, 256, %s31, [#allocation5], 128, 128, 8
    $region9: #{actor_critic_forward.1} parent=1 // pred_fallthru
      _
    // Predicated region
    $region10: #{actor_critic_forward.1} parent=1 // pred_check
      _
    $region11: #{actor_critic_forward.1} parent=1 // pred_check_branch
      %38 = sbr.rel (0) target = $region13
    $region12: #{actor_critic_forward.1} parent=1 // pred_region
      _
    $region13: #{actor_critic_forward.1} parent=1 // pred_fallthru
      _
    // Predicated region
    $region14: #{actor_critic_forward.1} parent=1 // pred_check
      _
    $region15: #{actor_critic_forward.1} parent=1 // pred_check_branch
      %40 = sbr.rel (0) target = $region17
    $region16: #{actor_critic_forward.1} parent=1 // pred_region
      %s42 = ssub.s32 2048, 2048
      %43 = vsyncadd [#allocation5], %s42
      %s44 = sshll.u32 [#allocation6], 4
      %s45 = int_to_ptr.vmem [resolvable:$true] %s44
      %50 = dma.hbm_to_vmem [thread:$0]  %s3, 2048, %s45, [#allocation5], 128, 128, 8
    $region17: #{actor_critic_forward.1} parent=1 // pred_fallthru
      _
    // Predicated region
    $region18: #{actor_critic_forward.1} parent=1 // pred_check
      _
    $region19: #{actor_critic_forward.1} parent=1 // pred_check_branch
      %52 = sbr.rel (0) target = $region21
    $region20: #{actor_critic_forward.1} parent=1 // pred_region
      _
    $region21: #{actor_critic_forward.1} parent=1 // pred_fallthru
      _
    // Predicated region
    $region22: #{actor_critic_forward.1} parent=1 // pred_check
      _
    $region23: #{actor_critic_forward.1} parent=1 // pred_check_branch
      %54 = sbr.rel (0) target = $region25
    $region24: #{actor_critic_forward.1} parent=1 // pred_region
      %s56 = ssub.s32 2048, 2048
      %57 = vsyncadd [#allocation8], %s56
      %s58 = sshll.u32 [#allocation7], 4
      %s59 = int_to_ptr.vmem [resolvable:$true] %s58
      %64 = dma.hbm_to_vmem [thread:$0]  %s5, 2048, %s59, [#allocation8], 128, 128, 8
    $region25: #{actor_critic_forward.1} parent=1 // pred_fallthru
      _
    // Predicated region
    $region26: #{actor_critic_forward.1} parent=1 // pred_check
      _
    $region27: #{actor_critic_forward.1} parent=1 // pred_check_branch
      %66 = sbr.rel (0) target = $region29
    $region28: #{actor_critic_forward.1} parent=1 // pred_region
      _
    $region29: #{actor_critic_forward.1} parent=1 // pred_fallthru
      _
    // Predicated region
    $region30: #{actor_critic_forward.1} parent=1 // pred_check
      _
    $region31: #{actor_critic_forward.1} parent=1 // pred_check_branch
      %68 = sbr.rel (0) target = $region33
    $region32: #{actor_critic_forward.1} parent=1 // pred_region
      %69 = dma.done [#allocation3], 128
    $region33: #{actor_critic_forward.1} parent=1 // pred_fallthru
      _
    // Predicated region
    $region34: #{actor_critic_forward.1} parent=1 // pred_check
      _
    $region35: #{actor_critic_forward.1} parent=1 // pred_check_branch
      %71 = sbr.rel (0) target = $region37
    $region36: #{actor_critic_forward.1} parent=1 // pred_region
      %72 = dma.done [#allocation5], 256
    $region37: #{actor_critic_forward.1} parent=1 // pred_fallthru
      _
    // Predicated region
    $region38: #{actor_critic_forward.1} parent=1 // pred_check
      _
    $region39: #{actor_critic_forward.1} parent=1 // pred_check_branch
      %74 = sbr.rel (0) target = $region41
    $region40: #{actor_critic_forward.1} parent=1 // pred_region
      %75 = dma.done [#allocation5], 2048
    $region41: #{actor_critic_forward.1} parent=1 // pred_fallthru
      _
    // Predicated region
    $region42: #{actor_critic_forward.1} parent=1 // pred_check
      _
    $region43: #{actor_critic_forward.1} parent=1 // pred_check_branch
      %77 = sbr.rel (0) target = $region45
    $region44: #{actor_critic_forward.1} parent=1 // pred_region
      %78 = dma.done [#allocation8], 2048
    $region45: #{actor_critic_forward.1} parent=1 // pred_fallthru
      _
    %v79 = vld [vmem:[#allocation2] sm:$0xff]
    %v80 = vld [vmem:[#allocation4] sm:$0xff]
    %v81 = vld [vmem:[#allocation4 + $0x8] sm:$0xff]
    %v82 = vld [vmem:[%s2] sm:$0x1]
    %v84 = vlaneseq
    %v85 = vshrl.u32 %v84, 7
    %v86 = vsub.s32 0, %v85
    %v87 = vrot.slane %v82, %v86
    %vm89 = vcmask 130048
    %v91 = vsel %vm89, %v79, 0
    %93 = vmatprep.subr.mxu0 0.0
    %94 = vmatpush1.msra.mxu0 %v80
    %95 = vmatprep.subr.mxu0 0.0
    %96 = vmatpush1.msra.mxu0 %v81
    %97 = vmatprep.subr.mxu0 0.0
    %98 = vmatpush1.msra.mxu0 0.0
    %99 = vmatprep.subr.mxu0 0.0
    %100 = vmatpush1.msra.mxu0 0.0
    %101 = vmatprep.subr.mxu0 0.0
    %102 = vmatpush1.msra.mxu0 0.0
    %103 = vmatprep.subr.mxu0 0.0
    %104 = vmatpush1.msra.mxu0 0.0
    %105 = vmatprep.subr.mxu0 0.0
    %106 = vmatpush1.msra.mxu0 0.0
    %107 = vmatprep.subr.mxu0 0.0
    %108 = vmatpush1.msra.mxu0 0.0
    %109 = vmatprep.subr.mxu0 0.0
    %110 = vmatpush1.msra.mxu0 0.0
    %111 = vmatprep.subr.mxu0 0.0
    %112 = vmatpush1.msra.mxu0 0.0
    %113 = vmatprep.subr.mxu0 0.0
    %114 = vmatpush1.msra.mxu0 0.0
    %115 = vmatprep.subr.mxu0 0.0
    %116 = vmatpush1.msra.mxu0 0.0
    %117 = vmatprep.subr.mxu0 0.0
    %118 = vmatpush1.msra.mxu0 0.0
    %119 = vmatprep.subr.mxu0 0.0
    %120 = vmatpush1.msra.mxu0 0.0
    %121 = vmatprep.subr.mxu0 0.0
    %122 = vmatpush1.msra.mxu0 0.0
    %123 = vmatprep.subr.mxu0 0.0
    %124 = vmatpush1.msra.mxu0 0.0
    %125 = vmatprep.subr.mxu0 0.0
    %126 = vmatpush1.msra.mxu0 0.0
    %127 = vmatprep.subr.mxu0 0.0
    %128 = vmatpush1.msra.mxu0 0.0
    %129 = vmatprep.subr.mxu0 0.0
    %130 = vmatpush1.msra.mxu0 0.0
    %131 = vmatprep.subr.mxu0 0.0
    %132 = vmatpush1.msra.mxu0 0.0
    %133 = vmatprep.subr.mxu0 0.0
    %134 = vmatpush1.msra.mxu0 0.0
    %135 = vmatprep.subr.mxu0 0.0
    %136 = vmatpush1.msra.mxu0 0.0
    %137 = vmatprep.subr.mxu0 0.0
    %138 = vmatpush1.msra.mxu0 0.0
    %139 = vmatprep.subr.mxu0 0.0
    %140 = vmatpush1.msra.mxu0 0.0
    %141 = vmatprep.subr.mxu0 0.0
    %142 = vmatpush1.msra.mxu0 0.0
    %143 = vmatprep.subr.mxu0 0.0
    %144 = vmatpush1.msra.mxu0 0.0
    %145 = vmatprep.subr.mxu0 0.0
    %146 = vmatpush1.msra.mxu0 0.0
    %147 = vmatprep.subr.mxu0 0.0
    %148 = vmatpush1.msra.mxu0 0.0
    %149 = vmatprep.subr.mxu0 0.0
    %150 = vmatpush1.msra.mxu0 0.0
    %151 = vmatprep.subr.mxu0 0.0
    %152 = vmatpush1.msra.mxu0 0.0
    %153 = vmatprep.subr.mxu0 0.0
    %154 = vmatpush1.msra.mxu0 0.0
    %155 = vmatprep.subr.mxu0 0.0
    %156 = vmatpush1.msra.mxu0 0.0
    %157 = vmatprep.mubr.f32.mxu0 0.0
    %158 = vmatmul.mubr.f32.gmra.mrb[0].mxu0 %v91
    %v159 = vpop.f32.mrb[0].mxu0
    %v160 = vadd.f32 %v87, %v159
    %v161 = vpop.f32.mrb[0].mxu0
    %162 = vdwg.mxu0
    %v163 = vmax.f32 %v160, 0.0
    %v164 = vld [vmem:[#allocation6] sm:$0xff]
    %v165 = vld [vmem:[#allocation6 + $0x8] sm:$0xff]
    %v166 = vld [vmem:[#allocation6 + $0x10] sm:$0xff]
    %v167 = vld [vmem:[#allocation6 + $0x18] sm:$0xff]
    %v168 = vld [vmem:[#allocation6 + $0x20] sm:$0xff]
    %v169 = vld [vmem:[#allocation6 + $0x28] sm:$0xff]
    %v170 = vld [vmem:[#allocation6 + $0x30] sm:$0xff]
    %v171 = vld [vmem:[#allocation6 + $0x38] sm:$0xff]
    %v172 = vld [vmem:[#allocation6 + $0x40] sm:$0xff]
    %v173 = vld [vmem:[#allocation6 + $0x48] sm:$0xff]
    %v174 = vld [vmem:[#allocation6 + $0x50] sm:$0xff]
    %v175 = vld [vmem:[#allocation6 + $0x58] sm:$0xff]
    %v176 = vld [vmem:[#allocation6 + $0x60] sm:$0xff]
    %v177 = vld [vmem:[#allocation6 + $0x68] sm:$0xff]
    %v178 = vld [vmem:[#allocation6 + $0x70] sm:$0xff]
    %v179 = vld [vmem:[#allocation6 + $0x78] sm:$0xff]
    %v180 = vld [vmem:[%s4] sm:$0x1]
    %v182 = vlaneseq
    %v183 = vshrl.u32 %v182, 7
    %v184 = vsub.s32 0, %v183
    %v185 = vrot.slane %v180, %v184
    %187 = vmatprep.subr.mxu0 0.0
    %188 = vmatpush1.msra.mxu0 %v164
    %189 = vmatprep.subr.mxu0 0.0
    %190 = vmatpush1.msra.mxu0 %v165
    %191 = vmatprep.subr.mxu0 0.0
    %192 = vmatpush1.msra.mxu0 %v166
    %193 = vmatprep.subr.mxu0 0.0
    %194 = vmatpush1.msra.mxu0 %v167
    %195 = vmatprep.subr.mxu0 0.0
    %196 = vmatpush1.msra.mxu0 %v168
    %197 = vmatprep.subr.mxu0 0.0
    %198 = vmatpush1.msra.mxu0 %v169
    %199 = vmatprep.subr.mxu0 0.0
    %200 = vmatpush1.msra.mxu0 %v170
    %201 = vmatprep.subr.mxu0 0.0
    %202 = vmatpush1.msra.mxu0 %v171
    %203 = vmatprep.subr.mxu0 0.0
    %204 = vmatpush1.msra.mxu0 %v172
    %205 = vmatprep.subr.mxu0 0.0
    %206 = vmatpush1.msra.mxu0 %v173
    %207 = vmatprep.subr.mxu0 0.0
    %208 = vmatpush1.msra.mxu0 %v174
    %209 = vmatprep.subr.mxu0 0.0
    %210 = vmatpush1.msra.mxu0 %v175
    %211 = vmatprep.subr.mxu0 0.0
    %212 = vmatpush1.msra.mxu0 %v176
    %213 = vmatprep.subr.mxu0 0.0
    %214 = vmatpush1.msra.mxu0 %v177
    %215 = vmatprep.subr.mxu0 0.0
    %216 = vmatpush1.msra.mxu0 %v178
    %217 = vmatprep.subr.mxu0 0.0
    %218 = vmatpush1.msra.mxu0 %v179
    %219 = vmatprep.subr.mxu0 0.0
    %220 = vmatpush1.msra.mxu0 0.0
    %221 = vmatprep.subr.mxu0 0.0
    %222 = vmatpush1.msra.mxu0 0.0
    %223 = vmatprep.subr.mxu0 0.0
    %224 = vmatpush1.msra.mxu0 0.0
    %225 = vmatprep.subr.mxu0 0.0
    %226 = vmatpush1.msra.mxu0 0.0
    %227 = vmatprep.subr.mxu0 0.0
    %228 = vmatpush1.msra.mxu0 0.0
    %229 = vmatprep.subr.mxu0 0.0
    %230 = vmatpush1.msra.mxu0 0.0
    %231 = vmatprep.subr.mxu0 0.0
    %232 = vmatpush1.msra.mxu0 0.0
    %233 = vmatprep.subr.mxu0 0.0
    %234 = vmatpush1.msra.mxu0 0.0
    %235 = vmatprep.subr.mxu0 0.0
    %236 = vmatpush1.msra.mxu0 0.0
    %237 = vmatprep.subr.mxu0 0.0
    %238 = vmatpush1.msra.mxu0 0.0
    %239 = vmatprep.subr.mxu0 0.0
    %240 = vmatpush1.msra.mxu0 0.0
    %241 = vmatprep.subr.mxu0 0.0
    %242 = vmatpush1.msra.mxu0 0.0
    %243 = vmatprep.subr.mxu0 0.0
    %244 = vmatpush1.msra.mxu0 0.0
    %245 = vmatprep.subr.mxu0 0.0
    %246 = vmatpush1.msra.mxu0 0.0
    %247 = vmatprep.subr.mxu0 0.0
    %248 = vmatpush1.msra.mxu0 0.0
    %249 = vmatprep.subr.mxu0 0.0
    %250 = vmatpush1.msra.mxu0 0.0
    %251 = vmatprep.mubr.f32.mxu0 0.0
    %252 = vmatmul.mubr.f32.gmra.mrb[0].mxu0 %v163
    %v253 = vpop.f32.mrb[0].mxu0
    %v254 = vadd.f32 %v185, %v253
    %v255 = vpop.f32.mrb[0].mxu0
    %256 = vdwg.mxu0
    %v257 = vmax.f32 %v254, 0.0
    %v258 = vld [vmem:[#allocation7] sm:$0xff]
    %v259 = vld [vmem:[#allocation7 + $0x8] sm:$0xff]
    %v260 = vld [vmem:[#allocation7 + $0x10] sm:$0xff]
    %v261 = vld [vmem:[#allocation7 + $0x18] sm:$0xff]
    %v262 = vld [vmem:[#allocation7 + $0x20] sm:$0xff]
    %v263 = vld [vmem:[#allocation7 + $0x28] sm:$0xff]
    %v264 = vld [vmem:[#allocation7 + $0x30] sm:$0xff]
    %v265 = vld [vmem:[#allocation7 + $0x38] sm:$0xff]
    %v266 = vld [vmem:[#allocation7 + $0x40] sm:$0xff]
    %v267 = vld [vmem:[#allocation7 + $0x48] sm:$0xff]
    %v268 = vld [vmem:[#allocation7 + $0x50] sm:$0xff]
    %v269 = vld [vmem:[#allocation7 + $0x58] sm:$0xff]
    %v270 = vld [vmem:[#allocation7 + $0x60] sm:$0xff]
    %v271 = vld [vmem:[#allocation7 + $0x68] sm:$0xff]
    %v272 = vld [vmem:[#allocation7 + $0x70] sm:$0xff]
    %v273 = vld [vmem:[#allocation7 + $0x78] sm:$0xff]
    %v274 = vld [vmem:[%s6] sm:$0x1]
    %v276 = vlaneseq
    %v277 = vshrl.u32 %v276, 7
    %v278 = vsub.s32 0, %v277
    %v279 = vrot.slane %v274, %v278
    %281 = vmatprep.subr.mxu0 0.0
    %282 = vmatpush1.msra.mxu0 %v258
    %283 = vmatprep.subr.mxu0 0.0
    %284 = vmatpush1.msra.mxu0 %v259
    %285 = vmatprep.subr.mxu0 0.0
    %286 = vmatpush1.msra.mxu0 %v260
    %287 = vmatprep.subr.mxu0 0.0
    %288 = vmatpush1.msra.mxu0 %v261
    %289 = vmatprep.subr.mxu0 0.0
    %290 = vmatpush1.msra.mxu0 %v262
    %291 = vmatprep.subr.mxu0 0.0
    %292 = vmatpush1.msra.mxu0 %v263
    %293 = vmatprep.subr.mxu0 0.0
    %294 = vmatpush1.msra.mxu0 %v264
    %295 = vmatprep.subr.mxu0 0.0
    %296 = vmatpush1.msra.mxu0 %v265
    %297 = vmatprep.subr.mxu0 0.0
    %298 = vmatpush1.msra.mxu0 %v266
    %299 = vmatprep.subr.mxu0 0.0
    %300 = vmatpush1.msra.mxu0 %v267
    %301 = vmatprep.subr.mxu0 0.0
    %302 = vmatpush1.msra.mxu0 %v268
    %303 = vmatprep.subr.mxu0 0.0
    %304 = vmatpush1.msra.mxu0 %v269
    %305 = vmatprep.subr.mxu0 0.0
    %306 = vmatpush1.msra.mxu0 %v270
    %307 = vmatprep.subr.mxu0 0.0
    %308 = vmatpush1.msra.mxu0 %v271
    %309 = vmatprep.subr.mxu0 0.0
    %310 = vmatpush1.msra.mxu0 %v272
    %311 = vmatprep.subr.mxu0 0.0
    %312 = vmatpush1.msra.mxu0 %v273
    %313 = vmatprep.subr.mxu0 0.0
    %314 = vmatpush1.msra.mxu0 0.0
    %315 = vmatprep.subr.mxu0 0.0
    %316 = vmatpush1.msra.mxu0 0.0
    %317 = vmatprep.subr.mxu0 0.0
    %318 = vmatpush1.msra.mxu0 0.0
    %319 = vmatprep.subr.mxu0 0.0
    %320 = vmatpush1.msra.mxu0 0.0
    %321 = vmatprep.subr.mxu0 0.0
    %322 = vmatpush1.msra.mxu0 0.0
    %323 = vmatprep.subr.mxu0 0.0
    %324 = vmatpush1.msra.mxu0 0.0
    %325 = vmatprep.subr.mxu0 0.0
    %326 = vmatpush1.msra.mxu0 0.0
    %327 = vmatprep.subr.mxu0 0.0
    %328 = vmatpush1.msra.mxu0 0.0
    %329 = vmatprep.subr.mxu0 0.0
    %330 = vmatpush1.msra.mxu0 0.0
    %331 = vmatprep.subr.mxu0 0.0
    %332 = vmatpush1.msra.mxu0 0.0
    %333 = vmatprep.subr.mxu0 0.0
    %334 = vmatpush1.msra.mxu0 0.0
    %335 = vmatprep.subr.mxu0 0.0
    %336 = vmatpush1.msra.mxu0 0.0
    %337 = vmatprep.subr.mxu0 0.0
    %338 = vmatpush1.msra.mxu0 0.0
    %339 = vmatprep.subr.mxu0 0.0
    %340 = vmatpush1.msra.mxu0 0.0
    %341 = vmatprep.subr.mxu0 0.0
    %342 = vmatpush1.msra.mxu0 0.0
    %343 = vmatprep.subr.mxu0 0.0
    %344 = vmatpush1.msra.mxu0 0.0
    %345 = vmatprep.mubr.f32.mxu0 0.0
    %346 = vmatmul.mubr.f32.gmra.mrb[0].mxu0 %v257
    %v347 = vpop.f32.mrb[0].mxu0
    %v348 = vadd.f32 %v279, %v347
    %v349 = vpop.f32.mrb[0].mxu0
    %350 = vdwg.mxu0
    %v351 = vlaneseq
    %v352 = vand.u32 %v351, 127
    %vm353 = vcmp.lt.s32.totalorder %v352, 4
    %v354 = vsel %vm353, %v348, -1e+30
    %355 = vmax.xlane.f32.xlu0 %v354
    %v356 = vpop.xlane.xlu0 %355
    %v357 = vsub.f32 %v354, %v356
    %v358 = vmul.f32 %v357, 1.442695
    %v359 = vpow.pop %v358
    %360 = vadd.xlane.f32.xlu0 %v359
    %v361 = vpop.xlane.xlu0 %360
    %v362 = vrcp.pop %v361
    %v363 = vmul.f32 %v359, %v362
    %vm364 = vcmp.eq.s32.totalorder %v352, 4
    %v365 = vsel %vm364, %v348, 0.0
    %v366 = vsel %vm353, %v363, %v365
    %367 = vst [vmem:[%s7] sm:$0xff] %v366
    // Predicated region
    $region46: #{actor_critic_forward.1} parent=1 // pred_check
      _
    $region47: #{actor_critic_forward.1} parent=1 // pred_check_branch
      %369 = sbr.rel (0) target = $region49
    $region48: #{actor_critic_forward.1} parent=1 // pred_region
      _
    $region49: #{actor_critic_forward.1} parent=1 // pred_fallthru
      _
    // Predicated region
    $region50: #{actor_critic_forward.1} parent=1 // pred_check
      _
    $region51: #{actor_critic_forward.1} parent=1 // pred_check_branch
      %371 = sbr.rel (0) target = $region53
    $region52: #{actor_critic_forward.1} parent=1 // pred_region
      _
    $region53: #{actor_critic_forward.1} parent=1 // pred_fallthru
      _
    %372 = vsyncpa [#allocation3], 1
    %373 = vsyncpa [#allocation5], 1
    %374 = vsyncpa [#allocation8], 1

</llo_original>
